<compile_context>
chip_gen: v6e
topology: v6e:2x2x1
jax: 0.10.0
libtpu: 0.0.40
codegen_flags: <defaults>
</compile_context>

<pallas_src>
import math

import jax
import jax.numpy as jnp
from jax.experimental import pallas as pl
from jax.experimental.pallas import tpu as pltpu


# ----------------------------- kernels ------------------------------------ #

def _mlp2_kernel(x_ref, w1_ref, b1_ref, wl_ref, bl_ref, o_ref):
    # h = relu(x @ W1 + b1); o = h @ W_last + b_last
    # (W_last is block-diagonal (k*width, k) in the packed layout, so this is
    #  the per-sample lane-segment reduction done on the MXU — no relayout.)
    h = jnp.dot(x_ref[...], w1_ref[...],
                preferred_element_type=jnp.float32) + b1_ref[...]
    h = jnp.maximum(h, 0.0)
    o = jnp.dot(h.astype(wl_ref.dtype), wl_ref[...],
                preferred_element_type=jnp.float32) + bl_ref[...]
    o_ref[...] = o.astype(o_ref.dtype)


def _mlp3_kernel(x_ref, w1_ref, b1_ref, w2_ref, b2_ref, wl_ref, bl_ref, o_ref):
    h1 = jnp.dot(x_ref[...], w1_ref[...],
                 preferred_element_type=jnp.float32) + b1_ref[...]
    h1 = jnp.maximum(h1, 0.0)
    h2 = jnp.dot(h1.astype(w2_ref.dtype), w2_ref[...],
                 preferred_element_type=jnp.float32) + b2_ref[...]
    h2 = jnp.maximum(h2, 0.0)
    o = jnp.dot(h2.astype(wl_ref.dtype), wl_ref[...],
                preferred_element_type=jnp.float32) + bl_ref[...]
    o_ref[...] = o.astype(o_ref.dtype)


# ----------------------------- helpers ------------------------------------ #

_LANE = 128
_SUBLANE = 8


def _round_up(n, m):
    return ((n + m - 1) // m) * m


def _pack_factor(nf, layer_dims):
    """Pack k consecutive batch rows along lanes when the feature dim is
    narrow, so the X DMA writes 512B-dense VMEM rows and the first MXU
    contraction dim is >=128.  Falls back to k=1 if the block-diagonal weight
    expansion would get large."""
    if nf <= 0 or nf >= _LANE or _LANE % nf != 0:
        return 1
    k = _LANE // nf
    blk_bytes = sum(_round_up(k * fi, _SUBLANE) * _round_up(k * fo, _LANE) * 4
                    for fi, fo in layer_dims)
    if blk_bytes > (8 << 20):
        return 1
    return k


def _vmem_limit_bytes():
    # Conservative fallback = 3/4 of v7x's 64 MiB physical VMEM per TensorCore.
    cap = 64 << 20
    try:
        cap = int(pltpu.get_tpu_info().vmem_capacity_bytes)
    except Exception:
        pass
    # v5e/v6e (128 MiB physical) -> 96 MiB; v7x (64 MiB) -> 48 MiB.
    return min((cap * 3) // 4, 96 << 20)


def _choose_tm(batch, k, nf, hidden_out_dims, x_itemsize,
               vmem_limit, weight_bytes, requested_tm=None):
    """Batch tile (in ORIGINAL rows), multiple of 8*k so the packed sublane
    count is a multiple of 8.  Sized from a VMEM budget with lane-padding
    accounted for (a narrow feature dim is padded to 128 lanes in VMEM)."""
    align = _SUBLANE * k
    # Bytes per ORIGINAL row resident in VMEM (lane padding included):
    x_row = _round_up(k * nf, _LANE) * x_itemsize / k          # double-buffered
    act_row = sum(_round_up(k * d, _LANE) * 4 for d in hidden_out_dims) / k
    out_row = _round_up(k, _LANE) * 4 / k                       # double-buffered
    per_row = 2.0 * x_row + act_row + 2.0 * out_row
    budget = max(vmem_limit - weight_bytes - (4 << 20), 4 << 20)
    tm_cap = int(budget // per_row)
    tm_cap = max(align, (tm_cap // align) * align)
    tm_cap = min(tm_cap, 16384)          # ~16K rows/step; >> 0.35us step overhead

    if requested_tm is not None:
        return max(align, (min(requested_tm, tm_cap) // align) * align)

    need = _round_up(max(batch, 1), align)
    if need <= tm_cap:
        # Whole batch fits in one tile.  For large batches keep >=2 grid steps
        # so both of v7x's TensorCores get work; single tile for tiny batches.
        if need >= 2048 and need >= 2 * align:
            return _round_up((need + 1) // 2, align)
        return need
    return tm_cap


# ----------------------------- wrapper ------------------------------------ #

def nn_forward(x, params, depth, *, tm=None, compute_dtype=jnp.float32):
    """Fused MLP forward.

    x:             (batch, n_features) f32
    params:        list of (W, b) with W in (in, out) layout, b in (1, out)
    depth:         2 or 3 (must match len(params))
    tm:            optional batch-tile size (original rows per grid step)
    compute_dtype: dtype fed to the MXU for x / weights (f32 default; bf16
                   halves HBM traffic on v6e/v7x but loosens numerics)
    """
    if depth not in (2, 3) or len(params) != depth:
        raise ValueError("depth must be 2 or 3 and match len(params)")

    batch, nf = x.shape
    layer_dims = [(w.shape[0], w.shape[1]) for w, _ in params]
    hidden_out_dims = [d for _, d in layer_dims[:-1]]
    k = _pack_factor(nf, layer_dims)
    x_itemsize = jnp.dtype(compute_dtype).itemsize

    # Kernel-side weights: block-diagonal kron(I_k, W) so k packed samples are
    # processed side-by-side along lanes.  Biases are lane-tiled to match.
    eye_k = jnp.eye(k, dtype=jnp.float32)
    kparams = []
    for w, b in params:
        w_blk = (jnp.kron(eye_k, w) if k > 1 else w).astype(compute_dtype)
        b_blk = (jnp.tile(b, (1, k)) if k > 1 else b).astype(jnp.float32)
        kparams.append((w_blk, b_blk))

    # VMEM-resident weight/bias footprint (sublane x lane padded).
    weight_bytes = 0
    for w_blk, b_blk in kparams:
        weight_bytes += (_round_up(w_blk.shape[0], _SUBLANE)
                         * _round_up(w_blk.shape[1], _LANE) * x_itemsize)
        weight_bytes += (_round_up(b_blk.shape[0], _SUBLANE)
                         * _round_up(b_blk.shape[1], _LANE) * 4)

    vmem_limit = _vmem_limit_bytes()
    tm = _choose_tm(batch, k, nf, hidden_out_dims, x_itemsize,
                    vmem_limit, weight_bytes, requested_tm=tm)

    batch_p = _round_up(batch, tm)
    if batch_p != batch:
        x = jnp.pad(x, ((0, batch_p - batch), (0, 0)))
    x = x.astype(compute_dtype)

    # Row-major zero-copy packing: (batch_p, nf) -> (batch_p/k, k*nf).
    rows_p = batch_p // k
    xp = x.reshape(rows_p, k * nf)
    tmp = tm // k                       # packed rows per grid step
    grid = (batch_p // tm,)

    flat_inputs = [xp]
    in_specs = [pl.BlockSpec((tmp, k * nf), lambda i: (i, 0))]
    for w_blk, b_blk in kparams:
        flat_inputs += [w_blk, b_blk]
        in_specs += [
            pl.BlockSpec(w_blk.shape, lambda i: (0, 0)),   # VMEM-resident
            pl.BlockSpec(b_blk.shape, lambda i: (0, 0)),
        ]

    kernel = _mlp2_kernel if depth == 2 else _mlp3_kernel

    out2d = pl.pallas_call(
        kernel,
        out_shape=jax.ShapeDtypeStruct((rows_p, k), jnp.float32),
        grid_spec=pltpu.PrefetchScalarGridSpec(
            num_scalar_prefetch=0,
            grid=grid,
            in_specs=in_specs,
            out_specs=pl.BlockSpec((tmp, k), lambda i: (i, 0)),
        ),
        compiler_params=pltpu.CompilerParams(
            dimension_semantics=("parallel",),   # megacore sharding on v7x
            vmem_limit_bytes=int(vmem_limit),
        ),
    )(*flat_inputs)

    # (rows_p, k) row-major == (batch_p,) in original row order.
    return out2d.reshape(batch_p)[:batch].reshape(batch, 1)


# ------------------------- deterministic params ---------------------------- #

def _init_linear(key, fan_in, fan_out):
    """PyTorch nn.Linear default init (uniform +/- 1/sqrt(fan_in)); W returned
    pre-transposed to (fan_in, fan_out) for x @ W."""
    kw, kb = jax.random.split(key)
    bound = 1.0 / math.sqrt(fan_in)
    w = jax.random.uniform(kw, (fan_in, fan_out), jnp.float32, -bound, bound)
    b = jax.random.uniform(kb, (1, fan_out), jnp.float32, -bound, bound)
    return w, b


def make_params(key, n_features, width, depth):
    if depth == 2:
        dims = [(n_features, width), (width, 1)]
    elif depth == 3:
        dims = [(n_features, width // 2), (width // 2, width), (width, 1)]
    else:
        raise ValueError("depth must be 2 or 3")
    keys = jax.random.split(key, len(dims))
    return [_init_linear(k, fi, fo) for k, (fi, fo) in zip(keys, dims)]


# ------------------------------- reference --------------------------------- #

def nn_forward_ref(x, params):
    h = x
    for i, (w, b) in enumerate(params):
        h = h @ w + b
        if i < len(params) - 1:
            h = jnp.maximum(h, 0.0)
    return h


# --------------------------------- main ------------------------------------ #

if __name__ == "__main__":
    config = {"n_features": 16, "hidden_layer_width": 32, "depth": 3}

    key = jax.random.PRNGKey(0)
    kx, kx2, kp = jax.random.split(key, 3)

    # Small depth-3 case (single batch tile, packed k=8).
    batch = 8
    x = jax.random.normal(kx, (batch, config["n_features"]), jnp.float32)
    params = make_params(
        kp, config["n_features"], config["hidden_layer_width"], config["depth"]
    )
    out = jax.block_until_ready(nn_forward(x, params, config["depth"]))
    ref = nn_forward_ref(x, params)
    assert out.shape == (batch, 1)
    assert jnp.allclose(out, ref, atol=1e-5, rtol=1e-5)

    # Depth-2 variant.
    params2 = make_params(kp, config["n_features"], config["hidden_layer_width"], 2)
    out2 = jax.block_until_ready(nn_forward(x, params2, 2))
    assert jnp.allclose(out2, nn_forward_ref(x, params2), atol=1e-5, rtol=1e-5)

    # Multi-tile batch grid (exercises batch tiling + padding + pipelining).
    batch_big = 300
    x_big = jax.random.normal(kx2, (batch_big, config["n_features"]), jnp.float32)
    out_big = jax.block_until_ready(
        nn_forward(x_big, params, config["depth"], tm=128)
    )
    ref_big = nn_forward_ref(x_big, params)
    assert out_big.shape == (batch_big, 1)
    assert jnp.allclose(out_big, ref_big, atol=1e-5, rtol=1e-5)

    # Gated bf16 path (halves HBM read of X on v6e/v7x); relaxed tolerance.
    out_bf16 = jax.block_until_ready(
        nn_forward(x_big, params, config["depth"], compute_dtype=jnp.bfloat16)
    )
    assert jnp.allclose(out_bf16, ref_big, atol=5e-2, rtol=5e-2)

    print("KERNEL_OK")
</pallas_src>

<mosaic_0001>
module attributes {stable_mosaic.version = 11 : i64} {
  func.func @_mlp3_kernel(%arg0: i32, %arg1: memref<8x128xf32, #tpu.memory_space<vmem>>, %arg2: memref<128x128xf32, #tpu.memory_space<vmem>>, %arg3: memref<1x128xf32, #tpu.memory_space<vmem>>, %arg4: memref<128x256xf32, #tpu.memory_space<vmem>>, %arg5: memref<1x256xf32, #tpu.memory_space<vmem>>, %arg6: memref<256x8xf32, #tpu.memory_space<vmem>>, %arg7: memref<1x8xf32, #tpu.memory_space<vmem>>, %arg8: memref<8x8xf32, #tpu.memory_space<vmem>>) attributes {dimension_semantics = [#tpu.dimension_semantics<parallel>], iteration_bounds = array<i64: 1>, scalar_prefetch = 0 : i64, scratch_operands = 0 : i64, tpu.core_type = #tpu.core_type<tc>, window_params = [{transform_indices = @transform_0, window_bounds = array<i64: 8, 128>}, {pipeline_mode = #tpu.pipeline_mode<synchronous>, transform_indices = @transform_1, window_bounds = array<i64: 128, 128>}, {pipeline_mode = #tpu.pipeline_mode<synchronous>, transform_indices = @transform_2, window_bounds = array<i64: 1, 128>}, {pipeline_mode = #tpu.pipeline_mode<synchronous>, transform_indices = @transform_3, window_bounds = array<i64: 128, 256>}, {pipeline_mode = #tpu.pipeline_mode<synchronous>, transform_indices = @transform_4, window_bounds = array<i64: 1, 256>}, {pipeline_mode = #tpu.pipeline_mode<synchronous>, transform_indices = @transform_5, window_bounds = array<i64: 256, 8>}, {pipeline_mode = #tpu.pipeline_mode<synchronous>, transform_indices = @transform_6, window_bounds = array<i64: 1, 8>}, {transform_indices = @transform_7, window_bounds = array<i64: 8, 8>}]} {
    %c0 = arith.constant 0 : index
    %c0_0 = arith.constant 0 : index
    %0 = vector.load %arg1[%c0, %c0_0] : memref<8x128xf32, #tpu.memory_space<vmem>>, vector<8x128xf32>
    %c0_1 = arith.constant 0 : index
    %c0_2 = arith.constant 0 : index
    %1 = vector.load %arg2[%c0_1, %c0_2] : memref<128x128xf32, #tpu.memory_space<vmem>>, vector<128x128xf32>
    %cst = arith.constant dense<0.000000e+00> : vector<8x128xf32>
    %2 = tpu.matmul %0, %1, %cst {dimension_numbers = #tpu.dot_dimension_numbers<[1], [0], [0], [1], [0, 0, 1, 1], [], []>} : vector<8x128xf32>, vector<128x128xf32>, vector<8x128xf32> -> vector<8x128xf32>
    %c0_3 = arith.constant 0 : index
    %c0_4 = arith.constant 0 : index
    %3 = vector.load %arg3[%c0_3, %c0_4] : memref<1x128xf32, #tpu.memory_space<vmem>>, vector<1x128xf32>
    %4 = vector.broadcast %3 : vector<1x128xf32> to vector<8x128xf32>
    %5 = arith.addf %2, %4 : vector<8x128xf32>
    %cst_5 = arith.constant 0.000000e+00 : f32
    %6 = vector.broadcast %cst_5 : f32 to vector<8x128xf32>
    %7 = arith.maximumf %5, %6 : vector<8x128xf32>
    %c0_6 = arith.constant 0 : index
    %c0_7 = arith.constant 0 : index
    %8 = vector.load %arg4[%c0_6, %c0_7] : memref<128x256xf32, #tpu.memory_space<vmem>>, vector<128x256xf32>
    %cst_8 = arith.constant dense<0.000000e+00> : vector<8x256xf32>
    %9 = tpu.matmul %7, %8, %cst_8 {dimension_numbers = #tpu.dot_dimension_numbers<[1], [0], [0], [1], [0, 0, 1, 1], [], []>} : vector<8x128xf32>, vector<128x256xf32>, vector<8x256xf32> -> vector<8x256xf32>
    %c0_9 = arith.constant 0 : index
    %c0_10 = arith.constant 0 : index
    %10 = vector.load %arg5[%c0_9, %c0_10] : memref<1x256xf32, #tpu.memory_space<vmem>>, vector<1x256xf32>
    %11 = vector.broadcast %10 : vector<1x256xf32> to vector<8x256xf32>
    %12 = arith.addf %9, %11 : vector<8x256xf32>
    %cst_11 = arith.constant 0.000000e+00 : f32
    %13 = vector.broadcast %cst_11 : f32 to vector<8x256xf32>
    %14 = arith.maximumf %12, %13 : vector<8x256xf32>
    %c0_12 = arith.constant 0 : index
    %c0_13 = arith.constant 0 : index
    %15 = vector.load %arg6[%c0_12, %c0_13] : memref<256x8xf32, #tpu.memory_space<vmem>>, vector<256x8xf32>
    %cst_14 = arith.constant dense<0.000000e+00> : vector<8x8xf32>
    %16 = tpu.matmul %14, %15, %cst_14 {dimension_numbers = #tpu.dot_dimension_numbers<[1], [0], [0], [1], [0, 0, 1, 1], [], []>} : vector<8x256xf32>, vector<256x8xf32>, vector<8x8xf32> -> vector<8x8xf32>
    %c0_15 = arith.constant 0 : index
    %c0_16 = arith.constant 0 : index
    %17 = vector.load %arg7[%c0_15, %c0_16] : memref<1x8xf32, #tpu.memory_space<vmem>>, vector<1x8xf32>
    %18 = vector.broadcast %17 : vector<1x8xf32> to vector<8x8xf32>
    %19 = arith.addf %16, %18 : vector<8x8xf32>
    %c0_17 = arith.constant 0 : index
    %c0_18 = arith.constant 0 : index
    %20 = vector.load %arg8[%c0_17, %c0_18] : memref<8x8xf32, #tpu.memory_space<vmem>>, vector<8x8xf32>
    tpu.vector_store %arg8[%c0_17, %c0_18], %19 {strides = array<i32>} : memref<8x8xf32, #tpu.memory_space<vmem>>, vector<8x8xf32>,
    return
  }
  func.func @transform_0(%arg0: i32) -> (i32, i32) {
    %c0_i32 = arith.constant 0 : i32
    %c0_i32_0 = arith.constant 0 : i32
    return %arg0, %c0_i32 : i32, i32
  }
  func.func @transform_1(%arg0: i32) -> (i32, i32) {
    %c0_i32 = arith.constant 0 : i32
    %c0_i32_0 = arith.constant 0 : i32
    %c0_i32_1 = arith.constant 0 : i32
    return %c0_i32, %c0_i32_0 : i32, i32
  }
  func.func @transform_2(%arg0: i32) -> (i32, i32) {
    %c0_i32 = arith.constant 0 : i32
    %c0_i32_0 = arith.constant 0 : i32
    %c0_i32_1 = arith.constant 0 : i32
    return %c0_i32, %c0_i32_0 : i32, i32
  }
  func.func @transform_3(%arg0: i32) -> (i32, i32) {
    %c0_i32 = arith.constant 0 : i32
    %c0_i32_0 = arith.constant 0 : i32
    %c0_i32_1 = arith.constant 0 : i32
    return %c0_i32, %c0_i32_0 : i32, i32
  }
  func.func @transform_4(%arg0: i32) -> (i32, i32) {
    %c0_i32 = arith.constant 0 : i32
    %c0_i32_0 = arith.constant 0 : i32
    %c0_i32_1 = arith.constant 0 : i32
    return %c0_i32, %c0_i32_0 : i32, i32
  }
  func.func @transform_5(%arg0: i32) -> (i32, i32) {
    %c0_i32 = arith.constant 0 : i32
    %c0_i32_0 = arith.constant 0 : i32
    %c0_i32_1 = arith.constant 0 : i32
    return %c0_i32, %c0_i32_0 : i32, i32
  }
  func.func @transform_6(%arg0: i32) -> (i32, i32) {
    %c0_i32 = arith.constant 0 : i32
    %c0_i32_0 = arith.constant 0 : i32
    %c0_i32_1 = arith.constant 0 : i32
    return %c0_i32, %c0_i32_0 : i32, i32
  }
  func.func @transform_7(%arg0: i32) -> (i32, i32) {
    %c0_i32 = arith.constant 0 : i32
    %c0_i32_0 = arith.constant 0 : i32
    return %arg0, %c0_i32 : i32, i32
  }
}

</mosaic_0001>

<llo_original>
// kernel: tpu_custom_call.1
$region0: #{tpu_custom_call.1}
  #allocation0 [shape = 'u32[]', space=smem, size = 0x4, offset = 0x4, fixed_abs, tag = 'smem constant byte address 0x4 - core index']
  #allocation1 [shape = 'u32[144,128]{1,0:T(1,128)}', space=vmem, size = 0x12000, scoped, tag = 'internal scratch']
  %s0 = inlined_call_operand.vmem [shape: f32[8,128], index: 0, kind: input, shape index: {}]
  %s1 = inlined_call_operand.hbm [shape: f32[128,128], index: 1, kind: input, shape index: {}]
  %s2 = inlined_call_operand.vmem [shape: f32[1,128], index: 2, kind: input, shape index: {}]
  %s3 = inlined_call_operand.vmem [shape: f32[128,256], index: 3, kind: input, shape index: {}]
  %s4 = inlined_call_operand.vmem [shape: f32[1,256], index: 4, kind: input, shape index: {}]
  %s5 = inlined_call_operand.vmem [shape: f32[256,8], index: 5, kind: input, shape index: {}]
  %s6 = inlined_call_operand.vmem [shape: f32[1,8], index: 6, kind: input, shape index: {}]
  %s7 = inlined_call_operand.hbm [shape: f32[8,8], index: 7, kind: output, shape index: {}]
  %s8 = sld [smem:[#allocation0]]
  $region42: #{tpu_custom_call.1} parent=0
    _
  %s10 = ssub.s32 1, %s8
  %s11 = scalar_select 0, %s10, %s8
  $region1: #{tpu_custom_call.1} parent=0
    #allocation2 [shape = 'u8[65536]{0}', space=vmem, size = 0x10000, scoped, tag = 'input window, operand 1, single buffered']
    #allocation3 [shape = 's32[1]{0}', space=sflag, size = 0x4, scoped, tag = 'scoped memory for tpu_custom_call.1']
    #allocation4 [shape = 's32[1]{0}', space=sflag, size = 0x4, scoped, tag = 'scoped memory for tpu_custom_call.1']
    #allocation5 [shape = 'u8[4096]{0}', space=vmem, size = 0x1000, scoped, tag = 'output window, operand 0, single buffered']
    %12 = vsyncpa [#allocation3], 0
    %13 = vsyncpa [#allocation4], 0
    // Predicated region
    $region2: #{tpu_custom_call.1} parent=1 // pred_check
      _
    $region3: #{tpu_custom_call.1} parent=1 // pred_check_branch
      %15 = sbr.rel (0) target = $region5
    $region4: #{tpu_custom_call.1} parent=1 // pred_region
      _
    $region5: #{tpu_custom_call.1} parent=1 // pred_fallthru
      _
    // Predicated region
    $region6: #{tpu_custom_call.1} parent=1 // pred_check
      _
    $region7: #{tpu_custom_call.1} parent=1 // pred_check_branch
      %17 = sbr.rel (0) target = $region9
    $region8: #{tpu_custom_call.1} parent=1 // pred_region
      %s19 = ssub.s32 2048, 2048
      %20 = vsyncadd [#allocation3], %s19
      %s21 = sshll.u32 [#allocation2], 4
      %s22 = int_to_ptr.vmem [resolvable:$true] %s21
      %27 = dma.hbm_to_vmem [thread:$0]  %s1, 2048, %s22, [#allocation3], 128, 128, 8
    $region9: #{tpu_custom_call.1} parent=1 // pred_fallthru
      _
    // Predicated region
    $region10: #{tpu_custom_call.1} parent=1 // pred_check
      _
    $region11: #{tpu_custom_call.1} parent=1 // pred_check_branch
      %29 = sbr.rel (0) target = $region13
    $region12: #{tpu_custom_call.1} parent=1 // pred_region
      _
    $region13: #{tpu_custom_call.1} parent=1 // pred_fallthru
      _
    // Predicated region
    $region14: #{tpu_custom_call.1} parent=1 // pred_check
      _
    $region15: #{tpu_custom_call.1} parent=1 // pred_check_branch
      %31 = sbr.rel (0) target = $region17
    $region16: #{tpu_custom_call.1} parent=1 // pred_region
      _
    $region17: #{tpu_custom_call.1} parent=1 // pred_fallthru
      _
    // Predicated region
    $region18: #{tpu_custom_call.1} parent=1 // pred_check
      _
    $region19: #{tpu_custom_call.1} parent=1 // pred_check_branch
      %33 = sbr.rel (0) target = $region21
    $region20: #{tpu_custom_call.1} parent=1 // pred_region
      _
    $region21: #{tpu_custom_call.1} parent=1 // pred_fallthru
      _
    // Predicated region
    $region22: #{tpu_custom_call.1} parent=1 // pred_check
      _
    $region23: #{tpu_custom_call.1} parent=1 // pred_check_branch
      %35 = sbr.rel (0) target = $region25
    $region24: #{tpu_custom_call.1} parent=1 // pred_region
      _
    $region25: #{tpu_custom_call.1} parent=1 // pred_fallthru
      _
    // Predicated region
    $region26: #{tpu_custom_call.1} parent=1 // pred_check
      _
    $region27: #{tpu_custom_call.1} parent=1 // pred_check_branch
      %37 = sbr.rel (0) target = $region29
    $region28: #{tpu_custom_call.1} parent=1 // pred_region
      _
    $region29: #{tpu_custom_call.1} parent=1 // pred_fallthru
      _
    // Predicated region
    $region30: #{tpu_custom_call.1} parent=1 // pred_check
      _
    $region31: #{tpu_custom_call.1} parent=1 // pred_check_branch
      %39 = sbr.rel (0) target = $region33
    $region32: #{tpu_custom_call.1} parent=1 // pred_region
      %40 = dma.done [#allocation3], 2048
    $region33: #{tpu_custom_call.1} parent=1 // pred_fallthru
      _
    %v41 = vld [vmem:[%s0] sm:$0xff]
    %v42 = vld [vmem:[#allocation2] sm:$0xff]
    %v43 = vld [vmem:[#allocation2 + $0x8] sm:$0xff]
    %v44 = vld [vmem:[#allocation2 + $0x10] sm:$0xff]
    %v45 = vld [vmem:[#allocation2 + $0x18] sm:$0xff]
    %v46 = vld [vmem:[#allocation2 + $0x20] sm:$0xff]
    %v47 = vld [vmem:[#allocation2 + $0x28] sm:$0xff]
    %v48 = vld [vmem:[#allocation2 + $0x30] sm:$0xff]
    %v49 = vld [vmem:[#allocation2 + $0x38] sm:$0xff]
    %v50 = vld [vmem:[#allocation2 + $0x40] sm:$0xff]
    %v51 = vld [vmem:[#allocation2 + $0x48] sm:$0xff]
    %v52 = vld [vmem:[#allocation2 + $0x50] sm:$0xff]
    %v53 = vld [vmem:[#allocation2 + $0x58] sm:$0xff]
    %v54 = vld [vmem:[#allocation2 + $0x60] sm:$0xff]
    %v55 = vld [vmem:[#allocation2 + $0x68] sm:$0xff]
    %v56 = vld [vmem:[#allocation2 + $0x70] sm:$0xff]
    %v57 = vld [vmem:[#allocation2 + $0x78] sm:$0xff]
    %v58 = vld [vmem:[%s2] sm:$0x1]
    %v60 = vlaneseq
    %v61 = vshrl.u32 %v60, 7
    %v62 = vsub.s32 0, %v61
    %v63 = vrot.slane %v58, %v62
    %65 = vmatprep.subr.mxu0 0.0
    %66 = vmatpush1.msra.mxu0 %v57
    %67 = vmatprep.subr.mxu0 0.0
    %68 = vmatpush1.msra.mxu0 %v56
    %69 = vmatprep.subr.mxu0 0.0
    %70 = vmatpush1.msra.mxu0 %v55
    %71 = vmatprep.subr.mxu0 0.0
    %72 = vmatpush1.msra.mxu0 %v54
    %73 = vmatprep.subr.mxu0 0.0
    %74 = vmatpush1.msra.mxu0 %v53
    %75 = vmatprep.subr.mxu0 0.0
    %76 = vmatpush1.msra.mxu0 %v52
    %77 = vmatprep.subr.mxu0 0.0
    %78 = vmatpush1.msra.mxu0 %v51
    %79 = vmatprep.subr.mxu0 0.0
    %80 = vmatpush1.msra.mxu0 %v50
    %81 = vmatprep.subr.mxu0 0.0
    %82 = vmatpush1.msra.mxu0 %v49
    %83 = vmatprep.subr.mxu0 0.0
    %84 = vmatpush1.msra.mxu0 %v48
    %85 = vmatprep.subr.mxu0 0.0
    %86 = vmatpush1.msra.mxu0 %v47
    %87 = vmatprep.subr.mxu0 0.0
    %88 = vmatpush1.msra.mxu0 %v46
    %89 = vmatprep.subr.mxu0 0.0
    %90 = vmatpush1.msra.mxu0 %v45
    %91 = vmatprep.subr.mxu0 0.0
    %92 = vmatpush1.msra.mxu0 %v44
    %93 = vmatprep.subr.mxu0 0.0
    %94 = vmatpush1.msra.mxu0 %v43
    %95 = vmatprep.subr.mxu0 0.0
    %96 = vmatpush1.msra.mxu0 %v42
    %97 = vmatprep.subr.mxu0 0.0
    %98 = vmatpush2.msra.mxu0 0.0
    %99 = vmatprep.subr.mxu0 0.0
    %100 = vmatpush2.msra.mxu0 0.0
    %101 = vmatprep.subr.mxu0 0.0
    %102 = vmatpush2.msra.mxu0 0.0
    %103 = vmatprep.subr.mxu0 0.0
    %104 = vmatpush2.msra.mxu0 0.0
    %105 = vmatprep.subr.mxu0 0.0
    %106 = vmatpush2.msra.mxu0 0.0
    %107 = vmatprep.subr.mxu0 0.0
    %108 = vmatpush2.msra.mxu0 0.0
    %109 = vmatprep.subr.mxu0 0.0
    %110 = vmatpush2.msra.mxu0 0.0
    %111 = vmatprep.subr.mxu0 0.0
    %112 = vmatpush2.msra.mxu0 0.0
    %113 = vmatprep.subr.mxu0 0.0
    %114 = vmatpush2.msra.mxu0 0.0
    %115 = vmatprep.subr.mxu0 0.0
    %116 = vmatpush2.msra.mxu0 0.0
    %117 = vmatprep.subr.mxu0 0.0
    %118 = vmatpush2.msra.mxu0 0.0
    %119 = vmatprep.subr.mxu0 0.0
    %120 = vmatpush2.msra.mxu0 0.0
    %121 = vmatprep.subr.mxu0 0.0
    %122 = vmatpush2.msra.mxu0 0.0
    %123 = vmatprep.subr.mxu0 0.0
    %124 = vmatpush2.msra.mxu0 0.0
    %125 = vmatprep.subr.mxu0 0.0
    %126 = vmatpush2.msra.mxu0 0.0
    %127 = vmatprep.subr.mxu0 0.0
    %128 = vmatpush2.msra.mxu0 0.0
    %129 = vmatprep.mubr.f32.mxu0 0.0
    %130 = vmatmul.mubr.f32.gmra.mxu0 %v41
    %v131 = vpop.f32.mrf.mxu0
    %v132 = vadd.f32 %v63, %v131
    %v133 = vpop.f32.mrf.mxu0
    %134 = vdwg.mxu0
    %v135 = vmax.f32 %v132, 0.0
    %v136 = vld [vmem:[%s3] sm:$0xff]
    %v137 = vld [vmem:[%s3 + $0x8] sm:$0xff]
    %v138 = vld [vmem:[%s3 + $0x10] sm:$0xff]
    %v139 = vld [vmem:[%s3 + $0x18] sm:$0xff]
    %v140 = vld [vmem:[%s3 + $0x20] sm:$0xff]
    %v141 = vld [vmem:[%s3 + $0x28] sm:$0xff]
    %v142 = vld [vmem:[%s3 + $0x30] sm:$0xff]
    %v143 = vld [vmem:[%s3 + $0x38] sm:$0xff]
    %v144 = vld [vmem:[%s3 + $0x40] sm:$0xff]
    %v145 = vld [vmem:[%s3 + $0x48] sm:$0xff]
    %v146 = vld [vmem:[%s3 + $0x50] sm:$0xff]
    %v147 = vld [vmem:[%s3 + $0x58] sm:$0xff]
    %v148 = vld [vmem:[%s3 + $0x60] sm:$0xff]
    %v149 = vld [vmem:[%s3 + $0x68] sm:$0xff]
    %v150 = vld [vmem:[%s3 + $0x70] sm:$0xff]
    %v151 = vld [vmem:[%s3 + $0x78] sm:$0xff]
    %v152 = vld [vmem:[%s3 + $0x80] sm:$0xff]
    %v153 = vld [vmem:[%s3 + $0x88] sm:$0xff]
    %v154 = vld [vmem:[%s3 + $0x90] sm:$0xff]
    %v155 = vld [vmem:[%s3 + $0x98] sm:$0xff]
    %v156 = vld [vmem:[%s3 + $0xa0] sm:$0xff]
    %v157 = vld [vmem:[%s3 + $0xa8] sm:$0xff]
    %v158 = vld [vmem:[%s3 + $0xb0] sm:$0xff]
    %v159 = vld [vmem:[%s3 + $0xb8] sm:$0xff]
    %v160 = vld [vmem:[%s3 + $0xc0] sm:$0xff]
    %v161 = vld [vmem:[%s3 + $0xc8] sm:$0xff]
    %v162 = vld [vmem:[%s3 + $0xd0] sm:$0xff]
    %v163 = vld [vmem:[%s3 + $0xd8] sm:$0xff]
    %v164 = vld [vmem:[%s3 + $0xe0] sm:$0xff]
    %v165 = vld [vmem:[%s3 + $0xe8] sm:$0xff]
    %v166 = vld [vmem:[%s3 + $0xf0] sm:$0xff]
    %v167 = vld [vmem:[%s3 + $0xf8] sm:$0xff]
    %v168 = vld [vmem:[%s4] sm:$0x3]
    %v170 = vlaneseq
    %v171 = vshrl.u32 %v170, 7
    %v172 = vsub.s32 0, %v171
    %v173 = vrot.slane %v168, %v172
    %v174 = vlaneseq
    %v175 = vshrl.u32 %v174, 7
    %v176 = vsub.s32 1, %v175
    %v177 = vrot.slane %v168, %v176
    %180 = vmatprep.subr.mxu0 %v167
    %181 = vmatpush1.msra.mxu0 %v166
    %182 = vmatprep.subr.mxu0 %v165
    %183 = vmatpush1.msra.mxu0 %v164
    %184 = vmatprep.subr.mxu0 %v163
    %185 = vmatpush1.msra.mxu0 %v162
    %186 = vmatprep.subr.mxu0 %v161
    %187 = vmatpush1.msra.mxu0 %v160
    %188 = vmatprep.subr.mxu0 %v159
    %189 = vmatpush1.msra.mxu0 %v158
    %190 = vmatprep.subr.mxu0 %v157
    %191 = vmatpush1.msra.mxu0 %v156
    %192 = vmatprep.subr.mxu0 %v155
    %193 = vmatpush1.msra.mxu0 %v154
    %194 = vmatprep.subr.mxu0 %v153
    %195 = vmatpush1.msra.mxu0 %v152
    %196 = vmatprep.subr.mxu0 %v151
    %197 = vmatpush1.msra.mxu0 %v150
    %198 = vmatprep.subr.mxu0 %v149
    %199 = vmatpush1.msra.mxu0 %v148
    %200 = vmatprep.subr.mxu0 %v147
    %201 = vmatpush1.msra.mxu0 %v146
    %202 = vmatprep.subr.mxu0 %v145
    %203 = vmatpush1.msra.mxu0 %v144
    %204 = vmatprep.subr.mxu0 %v143
    %205 = vmatpush1.msra.mxu0 %v142
    %206 = vmatprep.subr.mxu0 %v141
    %207 = vmatpush1.msra.mxu0 %v140
    %208 = vmatprep.subr.mxu0 %v139
    %209 = vmatpush1.msra.mxu0 %v138
    %210 = vmatprep.subr.mxu0 %v137
    %211 = vmatpush1.msra.mxu0 %v136
    %212 = vmatprep.subr.mxu0 0.0
    %213 = vmatpush2.msra.mxu0 0.0
    %214 = vmatprep.subr.mxu0 0.0
    %215 = vmatpush2.msra.mxu0 0.0
    %216 = vmatprep.subr.mxu0 0.0
    %217 = vmatpush2.msra.mxu0 0.0
    %218 = vmatprep.subr.mxu0 0.0
    %219 = vmatpush2.msra.mxu0 0.0
    %220 = vmatprep.subr.mxu0 0.0
    %221 = vmatpush2.msra.mxu0 0.0
    %222 = vmatprep.subr.mxu0 0.0
    %223 = vmatpush2.msra.mxu0 0.0
    %224 = vmatprep.subr.mxu0 0.0
    %225 = vmatpush2.msra.mxu0 0.0
    %226 = vmatprep.subr.mxu0 0.0
    %227 = vmatpush2.msra.mxu0 0.0
    %228 = vmatprep.subr.mxu0 0.0
    %229 = vmatpush2.msra.mxu0 0.0
    %230 = vmatprep.subr.mxu0 0.0
    %231 = vmatpush2.msra.mxu0 0.0
    %232 = vmatprep.subr.mxu0 0.0
    %233 = vmatpush2.msra.mxu0 0.0
    %234 = vmatprep.subr.mxu0 0.0
    %235 = vmatpush2.msra.mxu0 0.0
    %236 = vmatprep.subr.mxu0 0.0
    %237 = vmatpush2.msra.mxu0 0.0
    %238 = vmatprep.subr.mxu0 0.0
    %239 = vmatpush2.msra.mxu0 0.0
    %240 = vmatprep.subr.mxu0 0.0
    %241 = vmatpush2.msra.mxu0 0.0
    %242 = vmatprep.subr.mxu0 0.0
    %243 = vmatpush2.msra.mxu0 0.0
    %244 = vmatprep.mubr.f32.mxu0 0.0
    %245 = vmatmul.mubr.f32.gmra.mxu0 %v135
    %v246 = vpop.f32.mrf.mxu0
    %v247 = vadd.f32 %v173, %v246
    %v248 = vpop.f32.mrf.mxu0
    %v249 = vadd.f32 %v177, %v248
    %250 = vdwg.mxu0
    %v251 = vmax.f32 %v247, 0.0
    %v252 = vmax.f32 %v249, 0.0
    %v253 = vld [vmem:[%s5] sm:$0xff]
    %v254 = vld [vmem:[%s5 + $0x8] sm:$0xff]
    %v255 = vld [vmem:[%s5 + $0x10] sm:$0xff]
    %v256 = vld [vmem:[%s5 + $0x18] sm:$0xff]
    %v257 = vld [vmem:[%s5 + $0x20] sm:$0xff]
    %v258 = vld [vmem:[%s5 + $0x28] sm:$0xff]
    %v259 = vld [vmem:[%s5 + $0x30] sm:$0xff]
    %v260 = vld [vmem:[%s5 + $0x38] sm:$0xff]
    %v261 = vld [vmem:[%s5 + $0x40] sm:$0xff]
    %v262 = vld [vmem:[%s5 + $0x48] sm:$0xff]
    %v263 = vld [vmem:[%s5 + $0x50] sm:$0xff]
    %v264 = vld [vmem:[%s5 + $0x58] sm:$0xff]
    %v265 = vld [vmem:[%s5 + $0x60] sm:$0xff]
    %v266 = vld [vmem:[%s5 + $0x68] sm:$0xff]
    %v267 = vld [vmem:[%s5 + $0x70] sm:$0xff]
    %v268 = vld [vmem:[%s5 + $0x78] sm:$0xff]
    %v269 = vld [vmem:[%s5 + $0x80] sm:$0xff]
    %v270 = vld [vmem:[%s5 + $0x88] sm:$0xff]
    %v271 = vld [vmem:[%s5 + $0x90] sm:$0xff]
    %v272 = vld [vmem:[%s5 + $0x98] sm:$0xff]
    %v273 = vld [vmem:[%s5 + $0xa0] sm:$0xff]
    %v274 = vld [vmem:[%s5 + $0xa8] sm:$0xff]
    %v275 = vld [vmem:[%s5 + $0xb0] sm:$0xff]
    %v276 = vld [vmem:[%s5 + $0xb8] sm:$0xff]
    %v277 = vld [vmem:[%s5 + $0xc0] sm:$0xff]
    %v278 = vld [vmem:[%s5 + $0xc8] sm:$0xff]
    %v279 = vld [vmem:[%s5 + $0xd0] sm:$0xff]
    %v280 = vld [vmem:[%s5 + $0xd8] sm:$0xff]
    %v281 = vld [vmem:[%s5 + $0xe0] sm:$0xff]
    %v282 = vld [vmem:[%s5 + $0xe8] sm:$0xff]
    %v283 = vld [vmem:[%s5 + $0xf0] sm:$0xff]
    %v284 = vld [vmem:[%s5 + $0xf8] sm:$0xff]
    %v285 = vld [vmem:[%s6] sm:$0x1]
    %v287 = vlaneseq
    %v288 = vshrl.u32 %v287, 7
    %v289 = vsub.s32 0, %v288
    %v290 = vrot.slane %v285, %v289
    %292 = vmatprep.subr.mxu0 0.0
    %293 = vmatpush1.msra.mxu0 %v268
    %294 = vmatprep.subr.mxu0 0.0
    %295 = vmatpush1.msra.mxu0 %v267
    %296 = vmatprep.subr.mxu0 0.0
    %297 = vmatpush1.msra.mxu0 %v266
    %298 = vmatprep.subr.mxu0 0.0
    %299 = vmatpush1.msra.mxu0 %v265
    %300 = vmatprep.subr.mxu0 0.0
    %301 = vmatpush1.msra.mxu0 %v264
    %302 = vmatprep.subr.mxu0 0.0
    %303 = vmatpush1.msra.mxu0 %v263
    %304 = vmatprep.subr.mxu0 0.0
    %305 = vmatpush1.msra.mxu0 %v262
    %306 = vmatprep.subr.mxu0 0.0
    %307 = vmatpush1.msra.mxu0 %v261
    %308 = vmatprep.subr.mxu0 0.0
    %309 = vmatpush1.msra.mxu0 %v260
    %310 = vmatprep.subr.mxu0 0.0
    %311 = vmatpush1.msra.mxu0 %v259
    %312 = vmatprep.subr.mxu0 0.0
    %313 = vmatpush1.msra.mxu0 %v258
    %314 = vmatprep.subr.mxu0 0.0
    %315 = vmatpush1.msra.mxu0 %v257
    %316 = vmatprep.subr.mxu0 0.0
    %317 = vmatpush1.msra.mxu0 %v256
    %318 = vmatprep.subr.mxu0 0.0
    %319 = vmatpush1.msra.mxu0 %v255
    %320 = vmatprep.subr.mxu0 0.0
    %321 = vmatpush1.msra.mxu0 %v254
    %322 = vmatprep.subr.mxu0 0.0
    %323 = vmatpush1.msra.mxu0 %v253
    %324 = vmatprep.subr.mxu0 0.0
    %325 = vmatpush2.msra.mxu0 %v284
    %326 = vmatprep.subr.mxu0 0.0
    %327 = vmatpush2.msra.mxu0 %v283
    %328 = vmatprep.subr.mxu0 0.0
    %329 = vmatpush2.msra.mxu0 %v282
    %330 = vmatprep.subr.mxu0 0.0
    %331 = vmatpush2.msra.mxu0 %v281
    %332 = vmatprep.subr.mxu0 0.0
    %333 = vmatpush2.msra.mxu0 %v280
    %334 = vmatprep.subr.mxu0 0.0
    %335 = vmatpush2.msra.mxu0 %v279
    %336 = vmatprep.subr.mxu0 0.0
    %337 = vmatpush2.msra.mxu0 %v278
    %338 = vmatprep.subr.mxu0 0.0
    %339 = vmatpush2.msra.mxu0 %v277
    %340 = vmatprep.subr.mxu0 0.0
    %341 = vmatpush2.msra.mxu0 %v276
    %342 = vmatprep.subr.mxu0 0.0
    %343 = vmatpush2.msra.mxu0 %v275
    %344 = vmatprep.subr.mxu0 0.0
    %345 = vmatpush2.msra.mxu0 %v274
    %346 = vmatprep.subr.mxu0 0.0
    %347 = vmatpush2.msra.mxu0 %v273
    %348 = vmatprep.subr.mxu0 0.0
    %349 = vmatpush2.msra.mxu0 %v272
    %350 = vmatprep.subr.mxu0 0.0
    %351 = vmatpush2.msra.mxu0 %v271
    %352 = vmatprep.subr.mxu0 0.0
    %353 = vmatpush2.msra.mxu0 %v270
    %354 = vmatprep.subr.mxu0 0.0
    %355 = vmatpush2.msra.mxu0 %v269
    %356 = vmatprep.mubr.f32.mxu0 %v252
    %357 = vmatmul.mubr.f32.gmra.mxu0 %v251
    %v358 = vpop.f32.mrf.mxu0
    %v359 = vadd.f32 %v290, %v358
    %v360 = vpop.f32.mrf.mxu0
    %361 = vdwg.mxu0
    %vm362 = vcmask 64512
    %363 = vst.msk [vmem:[#allocation5] sm:$0xff] %vm362, %v359
    // Predicated region
    $region34: #{tpu_custom_call.1} parent=1 // pred_check
      _
    $region35: #{tpu_custom_call.1} parent=1 // pred_check_branch
      %365 = sbr.rel (0) target = $region37
    $region36: #{tpu_custom_call.1} parent=1 // pred_region
      %s367 = ssub.s32 128, 128
      %368 = vsyncadd [#allocation4], %s367
      %s370 = sshll.u32 [#allocation5], 4
      %s371 = int_to_ptr.vmem [resolvable:$true] %s370
      %373 = dma.vmem_to_hbm [thread:$0]  %s371, 128, %s7, [#allocation4]
    $region37: #{tpu_custom_call.1} parent=1 // pred_fallthru
      _
    // Predicated region
    $region38: #{tpu_custom_call.1} parent=1 // pred_check
      _
    $region39: #{tpu_custom_call.1} parent=1 // pred_check_branch
      %375 = sbr.rel (0) target = $region41
    $region40: #{tpu_custom_call.1} parent=1 // pred_region
      %376 = dma.done [#allocation4], 128
    $region41: #{tpu_custom_call.1} parent=1 // pred_fallthru
      _
    %377 = vsyncpa [#allocation3], 1
    %378 = vsyncpa [#allocation4], 1

</llo_original>
